<compile_context>
chip_gen: v7x
topology: tpu7x:2x2x1
jax: 0.10.0
libtpu: 0.0.40
codegen_flags: <defaults>
</compile_context>

<pallas_src>
import functools
import math

import numpy as np
import jax
import jax.numpy as jnp
from jax.experimental import pallas as pl
from jax.experimental.pallas import tpu as pltpu

LANES = 128
SUBLANES = 8
MAX_TILE_ROWS = 2048         # 2048*128*4B = 1 MiB per input per buffer
EPS = 1e-10
HALF_PI = 0.5 * math.pi


def _ceil_to(a, m):
    return ((a + m - 1) // m) * m


def _fit_sin2_coeffs(degree=6):
    """sin^2(pi/2*t) = u*P(u), u=t^2, t in [-1,1]; returns P's coeffs (Horner,
    highest degree first). Degree-6 least-squares fit, max abs error ~1e-7."""
    u = np.linspace(0.0, 1.0, 8193)
    f = np.sin(0.5 * np.pi * np.sqrt(u)) ** 2
    p = np.empty_like(u)
    p[0] = (np.pi ** 2) / 4.0            # limit of f(u)/u at u -> 0
    p[1:] = f[1:] / u[1:]
    coeffs = np.polyfit(u, p, degree)
    # Self-check of the approximation (float64, deterministic).
    err = np.max(np.abs(np.polyval(coeffs, u) * u - f))
    assert err < 1e-6, err
    return tuple(float(c) for c in coeffs)


_SIN2_COEFFS = _fit_sin2_coeffs()


def _num_tensorcores():
    """2 only on parts with two TensorCores (v7x / megacore v4,v5p), else 1."""
    try:
        info = pltpu.get_tpu_info()
        for name in ("num_cores", "core_count", "num_tensorcores",
                     "tensorcore_count"):
            v = getattr(info, name, None)
            if isinstance(v, int) and v >= 1:
                return max(1, min(2, v))
    except Exception:
        pass
    try:
        kind = jax.devices()[0].device_kind.lower()
    except Exception:
        return 1
    if "lite" in kind or "v5e" in kind or "v6" in kind:
        return 1
    if "v7" in kind or "v4" in kind or "v5p" in kind:
        return 2
    return 1


def _chi2_partials_kernel(x_ref, y_ref, acc_ref, *, red_axis):
    """Accumulate vreg-shaped (8,128) partial sums of sin^2 (total and t<=0).

    acc_ref block is (1, 32, 128): rows [0:8)=x total, [8:16)=x neg,
    [16:24)=y total, [24:32)=y neg.  The block index depends only on the
    (optional) core axis, so it stays VMEM-resident across the "arbitrary"
    row-tile axis and acts as a persistent accumulator.
    """
    j = pl.program_id(red_axis)

    @pl.when(j == 0)
    def _():
        acc_ref[...] = jnp.zeros_like(acc_ref)

    def tile_partials(v):
        t = jnp.tanh(v)                                 # EUP
        u = t * t
        p = _SIN2_COEFFS[0]
        for c in _SIN2_COEFFS[1:]:                      # Horner, 6 FMAs (VPU)
            p = p * u + c
        s2 = u * p                                      # == sin^2(pi/2 t)
        neg = jnp.where(t <= 0.0, s2, 0.0)              # bin0 contribution
        k = v.shape[0] // SUBLANES
        # Layout-preserving reshape + leading-axis reduce: plain VPU vreg adds,
        # no XLU sublane-reduce, no masked (1,128) stores.
        s2_8 = jnp.sum(s2.reshape(k, SUBLANES, LANES), axis=0)   # (8, 128)
        ng_8 = jnp.sum(neg.reshape(k, SUBLANES, LANES), axis=0)  # (8, 128)
        return s2_8, ng_8

    xs, xn = tile_partials(x_ref[...])
    ys, yn = tile_partials(y_ref[...])
    acc_ref[0, 0 * SUBLANES:1 * SUBLANES, :] += xs
    acc_ref[0, 1 * SUBLANES:2 * SUBLANES, :] += xn
    acc_ref[0, 2 * SUBLANES:3 * SUBLANES, :] += ys
    acc_ref[0, 3 * SUBLANES:4 * SUBLANES, :] += yn


def chi2_forward(x, y, batch_size, n_bin, *, ncores=None):
    """Pallas implementation of Chi2(batch_size, n_bin).forward(x, y)."""
    del n_bin  # unused by the reference forward pass (centers never read)

    xf = jnp.reshape(x, (-1,)).astype(jnp.float32)
    yf = jnp.reshape(y, (-1,)).astype(jnp.float32)
    n = xf.shape[0]
    assert yf.shape[0] == n, "x and y must contain the same number of elements"

    if ncores is None:
        ncores = _num_tensorcores()
    rows_needed = pl.cdiv(n, LANES)
    if rows_needed < ncores * SUBLANES:
        ncores = 1                              # too small to split

    # Balanced tile rounding (review fix): number of tiles first, then the
    # smallest 8-aligned tile that covers the rows -> padding stays tiny.
    per_core = pl.cdiv(rows_needed, ncores)
    tiles_per_core = pl.cdiv(per_core, MAX_TILE_ROWS)
    tile_r = _ceil_to(pl.cdiv(per_core, tiles_per_core), SUBLANES)
    per_core_rows = tiles_per_core * tile_r
    rows = ncores * per_core_rows
    padded = rows * LANES

    def to_slab(v):
        if padded != n:
            # Zero padding is exact: tanh(0)=0 -> sin^2=0 contributes nothing,
            # and bin1 uses the true element count n below.
            v = jnp.pad(v, (0, padded - n))
        return v.reshape(rows, LANES)

    xp, yp = to_slab(xf), to_slab(yf)

    acc_shape = jax.ShapeDtypeStruct((ncores, 4 * SUBLANES, LANES), jnp.float32)
    if ncores > 1:
        grid = (ncores, tiles_per_core)
        in_spec = pl.BlockSpec((tile_r, LANES),
                               lambda c, j: (c * tiles_per_core + j, 0))
        out_spec = pl.BlockSpec((1, 4 * SUBLANES, LANES), lambda c, j: (c, 0, 0))
        semantics = ("parallel", "arbitrary")
        red_axis = 1
    else:
        grid = (tiles_per_core,)
        in_spec = pl.BlockSpec((tile_r, LANES), lambda j: (j, 0))
        out_spec = pl.BlockSpec((1, 4 * SUBLANES, LANES), lambda j: (0, 0, 0))
        semantics = ("arbitrary",)
        red_axis = 0

    acc = pl.pallas_call(
        functools.partial(_chi2_partials_kernel, red_axis=red_axis),
        out_shape=acc_shape,
        grid_spec=pltpu.PrefetchScalarGridSpec(
            num_scalar_prefetch=0,
            grid=grid,
            in_specs=[in_spec, in_spec],
            out_specs=out_spec,
        ),
        compiler_params=pltpu.CompilerParams(
            dimension_semantics=semantics,
            vmem_limit_bytes=32 * 1024 * 1024,
        ),
    )(xp, yp)

    # O(1) combine of the per-core vreg partials (single cross-sublane/lane
    # reduce per quantity) and the 3-term chi2.
    xs_tot = jnp.sum(acc[:, 0 * SUBLANES:1 * SUBLANES, :])
    xn_tot = jnp.sum(acc[:, 1 * SUBLANES:2 * SUBLANES, :])
    ys_tot = jnp.sum(acc[:, 2 * SUBLANES:3 * SUBLANES, :])
    yn_tot = jnp.sum(acc[:, 3 * SUBLANES:4 * SUBLANES, :])

    inv_bs = 1.0 / float(batch_size)
    nf = float(n)

    def bins(total_s2, neg_s2):
        b0 = neg_s2 * inv_bs                 # sum(sin^2 | t <= 0) == 1-cos^2
        b1 = (nf - total_s2) * inv_bs        # sum(1 - sin^2) = n - sum(sin^2)
        b2 = (total_s2 - neg_s2) * inv_bs    # sum(sin^2 | t > 0)
        return b0, b1, b2

    xh = bins(xs_tot, xn_tot)
    yh = bins(ys_tot, yn_tot)
    chi2 = sum((a - b) ** 2 / (a + b + EPS) for a, b in zip(xh, yh))

    # PyTorch returns a 1-element tensor (sum over dim=0 of a (3,1) tensor).
    return jnp.reshape(chi2, (1,))


def _reference_chi2(x, y, batch_size):
    """Pure-JAX transliteration of the PyTorch module (original formulas)."""
    def hist(v):
        t = jnp.tanh(v)
        x_cos = 1.0 - jnp.cos(HALF_PI * t) ** 2
        x_sin = 1.0 - jnp.sin(HALF_PI * t) ** 2
        return jnp.stack(
            [
                jnp.sum(x_cos * (t <= 0)),
                jnp.sum(x_sin),
                jnp.sum(x_cos * (t > 0)),
            ]
        )

    xh = hist(jnp.reshape(x, (-1,)).astype(jnp.float32)) / batch_size
    yh = hist(jnp.reshape(y, (-1,)).astype(jnp.float32)) / batch_size
    return jnp.sum((xh - yh) ** 2 / (xh + yh + EPS)).reshape(1)


if __name__ == "__main__":
    batch_size = 2
    n_bin = 3

    # Primary small case (NCHW-style conv-output shape), auto core count.
    kx, ky = jax.random.split(jax.random.PRNGKey(0))
    x = jax.random.normal(kx, (batch_size, 4, 16, 16), dtype=jnp.float32)
    y = jax.random.normal(ky, (batch_size, 4, 16, 16), dtype=jnp.float32)
    out = jax.block_until_ready(chi2_forward(x, y, batch_size, n_bin))
    ref = jax.block_until_ready(_reference_chi2(x, y, batch_size))
    assert out.shape == (1,)
    assert jnp.allclose(out, ref, rtol=2e-3, atol=1e-3), (out, ref)

    # Same case, forced 2-way core split (covers the 2-level grid branch;
    # on single-TC chips the "parallel" axis simply runs sequentially).
    out_b = jax.block_until_ready(chi2_forward(x, y, batch_size, n_bin, ncores=2))
    assert jnp.allclose(out_b, ref, rtol=2e-3, atol=1e-3), (out_b, ref)

    # Ragged case: exercises the (small) padding path.
    kx2, ky2 = jax.random.split(jax.random.PRNGKey(1))
    x2 = jax.random.normal(kx2, (batch_size, 4, 132, 132), dtype=jnp.float32)
    y2 = jax.random.normal(ky2, (batch_size, 4, 132, 132), dtype=jnp.float32)
    out2 = jax.block_until_ready(chi2_forward(x2, y2, batch_size, n_bin))
    ref2 = jax.block_until_ready(_reference_chi2(x2, y2, batch_size))
    assert jnp.allclose(out2, ref2, rtol=5e-3, atol=1e-3), (out2, ref2)

    # Multi-tile case: several reduction steps along the row-tile axis.
    kx3, ky3 = jax.random.split(jax.random.PRNGKey(2))
    x3 = jax.random.normal(kx3, (batch_size, 8, 200, 200), dtype=jnp.float32)
    y3 = jax.random.normal(ky3, (batch_size, 8, 200, 200), dtype=jnp.float32)
    out3 = jax.block_until_ready(chi2_forward(x3, y3, batch_size, n_bin))
    ref3 = jax.block_until_ready(_reference_chi2(x3, y3, batch_size))
    assert jnp.allclose(out3, ref3, rtol=5e-3, atol=1e-3), (out3, ref3)

    print("KERNEL_OK")
</pallas_src>

<mosaic_0001>
module attributes {stable_mosaic.version = 11 : i64} {
  func.func @_chi2_partials_kernel(%arg0: i32, %arg1: memref<16x128xf32, #tpu.memory_space<vmem>>, %arg2: memref<16x128xf32, #tpu.memory_space<vmem>>, %arg3: memref<1x32x128xf32, #tpu.memory_space<vmem>>) attributes {dimension_semantics = [#tpu.dimension_semantics<arbitrary>], iteration_bounds = array<i64: 1>, scalar_prefetch = 0 : i64, scratch_operands = 0 : i64, tpu.core_type = #tpu.core_type<tc>, window_params = [{transform_indices = @transform_0, window_bounds = array<i64: 16, 128>}, {transform_indices = @transform_1, window_bounds = array<i64: 16, 128>}, {pipeline_mode = #tpu.pipeline_mode<synchronous>, transform_indices = @transform_2, window_bounds = array<i64: 1, 32, 128>}]} {
    %c0_i32 = arith.constant 0 : i32
    %0 = arith.cmpi eq, %arg0, %c0_i32 : i32
    %1 = arith.extui %0 : i1 to i32
    %c0_i32_0 = arith.constant 0 : i32
    %2 = arith.cmpi ne, %1, %c0_i32_0 : i32
    scf.if %2 {
      %cst_46 = arith.constant 0.000000e+00 : f32
      %89 = vector.broadcast %cst_46 : f32 to vector<1x32x128xf32>
      %c0_47 = arith.constant 0 : index
      %c0_48 = arith.constant 0 : index
      %c0_49 = arith.constant 0 : index
      %90 = vector.load %arg3[%c0_47, %c0_48, %c0_49] : memref<1x32x128xf32, #tpu.memory_space<vmem>>, vector<1x32x128xf32>
      tpu.vector_store %arg3[%c0_47, %c0_48, %c0_49], %89 {strides = array<i32>} : memref<1x32x128xf32, #tpu.memory_space<vmem>>, vector<1x32x128xf32>,
    } else {
    }
    %c0 = arith.constant 0 : index
    %c0_1 = arith.constant 0 : index
    %3 = vector.load %arg1[%c0, %c0_1] : memref<16x128xf32, #tpu.memory_space<vmem>>, vector<16x128xf32>
    %4 = math.tanh %3 : vector<16x128xf32>
    %5 = arith.mulf %4, %4 : vector<16x128xf32>
    %cst = arith.constant 4.52848217E-5 : f32
    %6 = vector.broadcast %cst : f32 to vector<16x128xf32>
    %7 = arith.mulf %6, %5 : vector<16x128xf32>
    %cst_2 = arith.constant -9.55271651E-4 : f32
    %8 = vector.broadcast %cst_2 : f32 to vector<16x128xf32>
    %9 = arith.addf %7, %8 : vector<16x128xf32>
    %10 = arith.mulf %9, %5 : vector<16x128xf32>
    %cst_3 = arith.constant 0.012896915 : f32
    %11 = vector.broadcast %cst_3 : f32 to vector<16x128xf32>
    %12 = arith.addf %10, %11 : vector<16x128xf32>
    %13 = arith.mulf %12, %5 : vector<16x128xf32>
    %cst_4 = arith.constant -0.117662959 : f32
    %14 = vector.broadcast %cst_4 : f32 to vector<16x128xf32>
    %15 = arith.addf %13, %14 : vector<16x128xf32>
    %16 = arith.mulf %15, %5 : vector<16x128xf32>
    %cst_5 = arith.constant 0.66763097 : f32
    %17 = vector.broadcast %cst_5 : f32 to vector<16x128xf32>
    %18 = arith.addf %16, %17 : vector<16x128xf32>
    %19 = arith.mulf %18, %5 : vector<16x128xf32>
    %cst_6 = arith.constant -2.029356 : f32
    %20 = vector.broadcast %cst_6 : f32 to vector<16x128xf32>
    %21 = arith.addf %19, %20 : vector<16x128xf32>
    %22 = arith.mulf %21, %5 : vector<16x128xf32>
    %cst_7 = arith.constant 2.46740103 : f32
    %23 = vector.broadcast %cst_7 : f32 to vector<16x128xf32>
    %24 = arith.addf %22, %23 : vector<16x128xf32>
    %25 = arith.mulf %5, %24 : vector<16x128xf32>
    %cst_8 = arith.constant 0.000000e+00 : f32
    %26 = vector.broadcast %cst_8 : f32 to vector<16x128xf32>
    %27 = arith.cmpf ole, %4, %26 : vector<16x128xf32>
    %cst_9 = arith.constant 0.000000e+00 : f32
    %28 = vector.broadcast %cst_9 : f32 to vector<16x128xf32>
    %29 = arith.select %27, %25, %28 : vector<16x128xi1>, vector<16x128xf32>
    %30 = vector.shape_cast %25 : vector<16x128xf32> to vector<2x8x128xf32>
    %cst_10 = arith.constant dense<0.000000e+00> : vector<8x128xf32>
    %31 = vector.multi_reduction <add>, %30, %cst_10 [0] : vector<2x8x128xf32> to vector<8x128xf32>
    %32 = vector.shape_cast %29 : vector<16x128xf32> to vector<2x8x128xf32>
    %cst_11 = arith.constant dense<0.000000e+00> : vector<8x128xf32>
    %33 = vector.multi_reduction <add>, %32, %cst_11 [0] : vector<2x8x128xf32> to vector<8x128xf32>
    %c0_12 = arith.constant 0 : index
    %c0_13 = arith.constant 0 : index
    %34 = vector.load %arg2[%c0_12, %c0_13] : memref<16x128xf32, #tpu.memory_space<vmem>>, vector<16x128xf32>
    %35 = math.tanh %34 : vector<16x128xf32>
    %36 = arith.mulf %35, %35 : vector<16x128xf32>
    %cst_14 = arith.constant 4.52848217E-5 : f32
    %37 = vector.broadcast %cst_14 : f32 to vector<16x128xf32>
    %38 = arith.mulf %37, %36 : vector<16x128xf32>
    %cst_15 = arith.constant -9.55271651E-4 : f32
    %39 = vector.broadcast %cst_15 : f32 to vector<16x128xf32>
    %40 = arith.addf %38, %39 : vector<16x128xf32>
    %41 = arith.mulf %40, %36 : vector<16x128xf32>
    %cst_16 = arith.constant 0.012896915 : f32
    %42 = vector.broadcast %cst_16 : f32 to vector<16x128xf32>
    %43 = arith.addf %41, %42 : vector<16x128xf32>
    %44 = arith.mulf %43, %36 : vector<16x128xf32>
    %cst_17 = arith.constant -0.117662959 : f32
    %45 = vector.broadcast %cst_17 : f32 to vector<16x128xf32>
    %46 = arith.addf %44, %45 : vector<16x128xf32>
    %47 = arith.mulf %46, %36 : vector<16x128xf32>
    %cst_18 = arith.constant 0.66763097 : f32
    %48 = vector.broadcast %cst_18 : f32 to vector<16x128xf32>
    %49 = arith.addf %47, %48 : vector<16x128xf32>
    %50 = arith.mulf %49, %36 : vector<16x128xf32>
    %cst_19 = arith.constant -2.029356 : f32
    %51 = vector.broadcast %cst_19 : f32 to vector<16x128xf32>
    %52 = arith.addf %50, %51 : vector<16x128xf32>
    %53 = arith.mulf %52, %36 : vector<16x128xf32>
    %cst_20 = arith.constant 2.46740103 : f32
    %54 = vector.broadcast %cst_20 : f32 to vector<16x128xf32>
    %55 = arith.addf %53, %54 : vector<16x128xf32>
    %56 = arith.mulf %36, %55 : vector<16x128xf32>
    %cst_21 = arith.constant 0.000000e+00 : f32
    %57 = vector.broadcast %cst_21 : f32 to vector<16x128xf32>
    %58 = arith.cmpf ole, %35, %57 : vector<16x128xf32>
    %cst_22 = arith.constant 0.000000e+00 : f32
    %59 = vector.broadcast %cst_22 : f32 to vector<16x128xf32>
    %60 = arith.select %58, %56, %59 : vector<16x128xi1>, vector<16x128xf32>
    %61 = vector.shape_cast %56 : vector<16x128xf32> to vector<2x8x128xf32>
    %cst_23 = arith.constant dense<0.000000e+00> : vector<8x128xf32>
    %62 = vector.multi_reduction <add>, %61, %cst_23 [0] : vector<2x8x128xf32> to vector<8x128xf32>
    %63 = vector.shape_cast %60 : vector<16x128xf32> to vector<2x8x128xf32>
    %cst_24 = arith.constant dense<0.000000e+00> : vector<8x128xf32>
    %64 = vector.multi_reduction <add>, %63, %cst_24 [0] : vector<2x8x128xf32> to vector<8x128xf32>
    %c0_25 = arith.constant 0 : index
    %c0_26 = arith.constant 0 : index
    %c0_27 = arith.constant 0 : index
    %65 = vector.load %arg3[%c0_25, %c0_26, %c0_27] : memref<1x32x128xf32, #tpu.memory_space<vmem>>, vector<1x8x128xf32>
    %66 = vector.shape_cast %65 : vector<1x8x128xf32> to vector<8x128xf32>
    %67 = arith.addf %66, %31 : vector<8x128xf32>
    %c0_28 = arith.constant 0 : index
    %c0_29 = arith.constant 0 : index
    %c0_30 = arith.constant 0 : index
    %68 = vector.load %arg3[%c0_28, %c0_29, %c0_30] : memref<1x32x128xf32, #tpu.memory_space<vmem>>, vector<1x8x128xf32>
    %69 = vector.shape_cast %68 : vector<1x8x128xf32> to vector<8x128xf32>
    %70 = vector.shape_cast %67 : vector<8x128xf32> to vector<1x8x128xf32>
    tpu.vector_store %arg3[%c0_28, %c0_29, %c0_30], %70 {strides = array<i32>} : memref<1x32x128xf32, #tpu.memory_space<vmem>>, vector<1x8x128xf32>,
    %c0_31 = arith.constant 0 : index
    %c8 = arith.constant 8 : index
    %c0_32 = arith.constant 0 : index
    %71 = vector.load %arg3[%c0_31, %c8, %c0_32] : memref<1x32x128xf32, #tpu.memory_space<vmem>>, vector<1x8x128xf32>
    %72 = vector.shape_cast %71 : vector<1x8x128xf32> to vector<8x128xf32>
    %73 = arith.addf %72, %33 : vector<8x128xf32>
    %c0_33 = arith.constant 0 : index
    %c8_34 = arith.constant 8 : index
    %c0_35 = arith.constant 0 : index
    %74 = vector.load %arg3[%c0_33, %c8_34, %c0_35] : memref<1x32x128xf32, #tpu.memory_space<vmem>>, vector<1x8x128xf32>
    %75 = vector.shape_cast %74 : vector<1x8x128xf32> to vector<8x128xf32>
    %76 = vector.shape_cast %73 : vector<8x128xf32> to vector<1x8x128xf32>
    tpu.vector_store %arg3[%c0_33, %c8_34, %c0_35], %76 {strides = array<i32>} : memref<1x32x128xf32, #tpu.memory_space<vmem>>, vector<1x8x128xf32>,
    %c0_36 = arith.constant 0 : index
    %c16 = arith.constant 16 : index
    %c0_37 = arith.constant 0 : index
    %77 = vector.load %arg3[%c0_36, %c16, %c0_37] : memref<1x32x128xf32, #tpu.memory_space<vmem>>, vector<1x8x128xf32>
    %78 = vector.shape_cast %77 : vector<1x8x128xf32> to vector<8x128xf32>
    %79 = arith.addf %78, %62 : vector<8x128xf32>
    %c0_38 = arith.constant 0 : index
    %c16_39 = arith.constant 16 : index
    %c0_40 = arith.constant 0 : index
    %80 = vector.load %arg3[%c0_38, %c16_39, %c0_40] : memref<1x32x128xf32, #tpu.memory_space<vmem>>, vector<1x8x128xf32>
    %81 = vector.shape_cast %80 : vector<1x8x128xf32> to vector<8x128xf32>
    %82 = vector.shape_cast %79 : vector<8x128xf32> to vector<1x8x128xf32>
    tpu.vector_store %arg3[%c0_38, %c16_39, %c0_40], %82 {strides = array<i32>} : memref<1x32x128xf32, #tpu.memory_space<vmem>>, vector<1x8x128xf32>,
    %c0_41 = arith.constant 0 : index
    %c24 = arith.constant 24 : index
    %c0_42 = arith.constant 0 : index
    %83 = vector.load %arg3[%c0_41, %c24, %c0_42] : memref<1x32x128xf32, #tpu.memory_space<vmem>>, vector<1x8x128xf32>
    %84 = vector.shape_cast %83 : vector<1x8x128xf32> to vector<8x128xf32>
    %85 = arith.addf %84, %64 : vector<8x128xf32>
    %c0_43 = arith.constant 0 : index
    %c24_44 = arith.constant 24 : index
    %c0_45 = arith.constant 0 : index
    %86 = vector.load %arg3[%c0_43, %c24_44, %c0_45] : memref<1x32x128xf32, #tpu.memory_space<vmem>>, vector<1x8x128xf32>
    %87 = vector.shape_cast %86 : vector<1x8x128xf32> to vector<8x128xf32>
    %88 = vector.shape_cast %85 : vector<8x128xf32> to vector<1x8x128xf32>
    tpu.vector_store %arg3[%c0_43, %c24_44, %c0_45], %88 {strides = array<i32>} : memref<1x32x128xf32, #tpu.memory_space<vmem>>, vector<1x8x128xf32>,
    return
  }
  func.func @transform_0(%arg0: i32) -> (i32, i32) {
    %c0_i32 = arith.constant 0 : i32
    %c0_i32_0 = arith.constant 0 : i32
    return %arg0, %c0_i32 : i32, i32
  }
  func.func @transform_1(%arg0: i32) -> (i32, i32) {
    %c0_i32 = arith.constant 0 : i32
    %c0_i32_0 = arith.constant 0 : i32
    return %arg0, %c0_i32 : i32, i32
  }
  func.func @transform_2(%arg0: i32) -> (i32, i32, i32) {
    %c0_i32 = arith.constant 0 : i32
    %c0_i32_0 = arith.constant 0 : i32
    %c0_i32_1 = arith.constant 0 : i32
    %c0_i32_2 = arith.constant 0 : i32
    return %c0_i32, %c0_i32_0, %c0_i32_1 : i32, i32, i32
  }
}

</mosaic_0001>

<llo_original>
// kernel: tpu_custom_call.1
$region0: #{tpu_custom_call.1}
  #allocation0 [shape = 'u32[]', space=smem, size = 0x4, offset = 0x4, fixed_abs, tag = 'smem constant byte address 0x4 - core index']
  #allocation1 [shape = 'u32[144,128]{1,0:T(1,128)}', space=vmem, size = 0x12000, scoped, tag = 'internal scratch']
  %s0 = inlined_call_operand.hbm [shape: f32[16,128], index: 0, kind: input, shape index: {}]
  %s1 = inlined_call_operand.hbm [shape: f32[16,128], index: 1, kind: input, shape index: {}]
  %s2 = inlined_call_operand.hbm [shape: f32[1,32,128], index: 2, kind: output, shape index: {}]
  %s3 = sld [smem:[#allocation0]]
  $region30: #{tpu_custom_call.1} parent=0
    _
  %s5 = ssub.s32 1, %s3
  %s6 = scalar_select 0, %s5, %s3
  $region1: #{tpu_custom_call.1} parent=0
    #allocation2 [shape = 'u8[8192]{0}', space=vmem, size = 0x2000, scoped, tag = 'input window, operand 0, single buffered']
    #allocation3 [shape = 's32[1]{0}', space=sflag, size = 0x4, scoped, tag = 'scoped memory for tpu_custom_call.1']
    #allocation4 [shape = 's32[1]{0}', space=sflag, size = 0x4, scoped, tag = 'scoped memory for tpu_custom_call.1']
    #allocation5 [shape = 'u8[8192]{0}', space=vmem, size = 0x2000, scoped, tag = 'input window, operand 1, single buffered']
    #allocation6 [shape = 's32[1]{0}', space=sflag, size = 0x4, scoped, tag = 'scoped memory for tpu_custom_call.1']
    #allocation7 [shape = 'u8[16384]{0}', space=vmem, size = 0x4000, scoped, tag = 'output window, operand 0, single buffered']
    %7 = vsyncpa [#allocation3], 0
    %8 = vsyncpa [#allocation6], 0
    %9 = vsyncpa [#allocation4], 0
    // Predicated region
    $region2: #{tpu_custom_call.1} parent=1 // pred_check
      _
    $region3: #{tpu_custom_call.1} parent=1 // pred_check_branch
      %11 = sbr.rel (0) target = $region5
    $region4: #{tpu_custom_call.1} parent=1 // pred_region
      %s13 = ssub.s32 256, 256
      %14 = vsyncadd [#allocation3], %s13
      %s15 = sshll.u32 [#allocation2], 4
      %s16 = int_to_ptr.vmem [resolvable:$true] %s15
      %21 = dma.hbm_to_vmem [thread:$0]  %s0, 256, %s16, [#allocation3], 128, 128, 8
    $region5: #{tpu_custom_call.1} parent=1 // pred_fallthru
      _
    // Predicated region
    $region6: #{tpu_custom_call.1} parent=1 // pred_check
      _
    $region7: #{tpu_custom_call.1} parent=1 // pred_check_branch
      %23 = sbr.rel (0) target = $region9
    $region8: #{tpu_custom_call.1} parent=1 // pred_region
      %s25 = ssub.s32 256, 256
      %26 = vsyncadd [#allocation6], %s25
      %s27 = sshll.u32 [#allocation5], 4
      %s28 = int_to_ptr.vmem [resolvable:$true] %s27
      %33 = dma.hbm_to_vmem [thread:$0]  %s1, 256, %s28, [#allocation6], 128, 128, 8
    $region9: #{tpu_custom_call.1} parent=1 // pred_fallthru
      _
    // Predicated region
    $region10: #{tpu_custom_call.1} parent=1 // pred_check
      _
    $region11: #{tpu_custom_call.1} parent=1 // pred_check_branch
      %35 = sbr.rel (0) target = $region13
    $region12: #{tpu_custom_call.1} parent=1 // pred_region
      %36 = dma.done [#allocation3], 256
    $region13: #{tpu_custom_call.1} parent=1 // pred_fallthru
      _
    // Predicated region
    $region14: #{tpu_custom_call.1} parent=1 // pred_check
      _
    $region15: #{tpu_custom_call.1} parent=1 // pred_check_branch
      %38 = sbr.rel (0) target = $region17
    $region16: #{tpu_custom_call.1} parent=1 // pred_region
      %39 = dma.done [#allocation6], 256
    $region17: #{tpu_custom_call.1} parent=1 // pred_fallthru
      _
    %p40 = scmp.eq.s32.totalorder 0, 0
    // Predicated region
    $region18: #{tpu_custom_call.1} parent=1 // pred_check
      %p41 = pneg %p40
    $region19: #{tpu_custom_call.1} parent=1 // pred_check_branch
      %43 = sbr.rel (%p41) target = $region21
    $region20: #{tpu_custom_call.1} parent=1 // pred_region
      %44 = vst [vmem:[#allocation7] sm:$0xff] 0.0
      %45 = vst [vmem:[#allocation7 + $0x8] sm:$0xff] 0.0
      %46 = vst [vmem:[#allocation7 + $0x10] sm:$0xff] 0.0
      %47 = vst [vmem:[#allocation7 + $0x18] sm:$0xff] 0.0
    $region21: #{tpu_custom_call.1} parent=1 // pred_fallthru
      _
    %v48 = vld [vmem:[#allocation2] sm:$0xff]
    %v49 = vld [vmem:[#allocation2 + $0x8] sm:$0xff]
    %v50 = vtanh.pop %v48
    %v51 = vtanh.pop %v49
    %v52 = vmul.f32 %v50, %v50
    %v53 = vmul.f32 %v51, %v51
    %v54 = vmul.f32 %v52, 4.528482e-05
    %v55 = vmul.f32 %v53, 4.528482e-05
    %v56 = vadd.f32 %v54, -0.00095527165
    %v57 = vadd.f32 %v55, -0.00095527165
    %v58 = vmul.f32 %v56, %v52
    %v59 = vmul.f32 %v57, %v53
    %v60 = vadd.f32 %v58, 0.012896915
    %v61 = vadd.f32 %v59, 0.012896915
    %v62 = vmul.f32 %v60, %v52
    %v63 = vmul.f32 %v61, %v53
    %v64 = vadd.f32 %v62, -0.11766296
    %v65 = vadd.f32 %v63, -0.11766296
    %v66 = vmul.f32 %v64, %v52
    %v67 = vmul.f32 %v65, %v53
    %v68 = vadd.f32 %v66, 0.667631
    %v69 = vadd.f32 %v67, 0.667631
    %v70 = vmul.f32 %v68, %v52
    %v71 = vmul.f32 %v69, %v53
    %v72 = vadd.f32 %v70, -2.029356
    %v73 = vadd.f32 %v71, -2.029356
    %v74 = vmul.f32 %v72, %v52
    %v75 = vmul.f32 %v73, %v53
    %v76 = vadd.f32 %v74, 2.467401
    %v77 = vadd.f32 %v75, 2.467401
    %v78 = vmul.f32 %v52, %v76
    %v79 = vmul.f32 %v53, %v77
    %vm80 = vcmp.le.f32.partialorder %v50, 0.0
    %vm81 = vcmp.le.f32.partialorder %v51, 0.0
    %v82 = vsel %vm80, %v78, 0.0
    %v83 = vsel %vm81, %v79, 0.0
    %v84 = vadd.f32 %v78, %v79
    %v85 = vadd.f32 %v82, %v83
    %v86 = vld [vmem:[#allocation5] sm:$0xff]
    %v87 = vld [vmem:[#allocation5 + $0x8] sm:$0xff]
    %v88 = vtanh.pop %v86
    %v89 = vtanh.pop %v87
    %v90 = vmul.f32 %v88, %v88
    %v91 = vmul.f32 %v89, %v89
    %v92 = vmul.f32 %v90, 4.528482e-05
    %v93 = vmul.f32 %v91, 4.528482e-05
    %v94 = vadd.f32 %v92, -0.00095527165
    %v95 = vadd.f32 %v93, -0.00095527165
    %v96 = vmul.f32 %v94, %v90
    %v97 = vmul.f32 %v95, %v91
    %v98 = vadd.f32 %v96, 0.012896915
    %v99 = vadd.f32 %v97, 0.012896915
    %v100 = vmul.f32 %v98, %v90
    %v101 = vmul.f32 %v99, %v91
    %v102 = vadd.f32 %v100, -0.11766296
    %v103 = vadd.f32 %v101, -0.11766296
    %v104 = vmul.f32 %v102, %v90
    %v105 = vmul.f32 %v103, %v91
    %v106 = vadd.f32 %v104, 0.667631
    %v107 = vadd.f32 %v105, 0.667631
    %v108 = vmul.f32 %v106, %v90
    %v109 = vmul.f32 %v107, %v91
    %v110 = vadd.f32 %v108, -2.029356
    %v111 = vadd.f32 %v109, -2.029356
    %v112 = vmul.f32 %v110, %v90
    %v113 = vmul.f32 %v111, %v91
    %v114 = vadd.f32 %v112, 2.467401
    %v115 = vadd.f32 %v113, 2.467401
    %v116 = vmul.f32 %v90, %v114
    %v117 = vmul.f32 %v91, %v115
    %vm118 = vcmp.le.f32.partialorder %v88, 0.0
    %vm119 = vcmp.le.f32.partialorder %v89, 0.0
    %v120 = vsel %vm118, %v116, 0.0
    %v121 = vsel %vm119, %v117, 0.0
    %v122 = vadd.f32 %v116, %v117
    %v123 = vadd.f32 %v120, %v121
    %v124 = vld [vmem:[#allocation7] sm:$0xff]
    %v125 = vadd.f32 %v124, %v84
    %126 = vst [vmem:[#allocation7] sm:$0xff] %v125
    %v127 = vld [vmem:[#allocation7 + $0x8] sm:$0xff]
    %v128 = vadd.f32 %v127, %v85
    %129 = vst [vmem:[#allocation7 + $0x8] sm:$0xff] %v128
    %v130 = vld [vmem:[#allocation7 + $0x10] sm:$0xff]
    %v131 = vadd.f32 %v130, %v122
    %132 = vst [vmem:[#allocation7 + $0x10] sm:$0xff] %v131
    %v133 = vld [vmem:[#allocation7 + $0x18] sm:$0xff]
    %v134 = vadd.f32 %v133, %v123
    %135 = vst [vmem:[#allocation7 + $0x18] sm:$0xff] %v134
    // Predicated region
    $region22: #{tpu_custom_call.1} parent=1 // pred_check
      _
    $region23: #{tpu_custom_call.1} parent=1 // pred_check_branch
      %137 = sbr.rel (0) target = $region25
    $region24: #{tpu_custom_call.1} parent=1 // pred_region
      %s139 = ssub.s32 512, 512
      %140 = vsyncadd [#allocation4], %s139
      %s141 = sshll.u32 [#allocation7], 4
      %s142 = int_to_ptr.vmem [resolvable:$true] %s141
      %147 = dma.vmem_to_hbm [thread:$0]  %s142, 512, %s2, [#allocation4], 128, 128, 8
    $region25: #{tpu_custom_call.1} parent=1 // pred_fallthru
      _
    // Predicated region
    $region26: #{tpu_custom_call.1} parent=1 // pred_check
      _
    $region27: #{tpu_custom_call.1} parent=1 // pred_check_branch
      %149 = sbr.rel (0) target = $region29
    $region28: #{tpu_custom_call.1} parent=1 // pred_region
      %150 = dma.done [#allocation4], 512
    $region29: #{tpu_custom_call.1} parent=1 // pred_fallthru
      _
    %151 = vsyncpa [#allocation3], 1
    %152 = vsyncpa [#allocation6], 1
    %153 = vsyncpa [#allocation4], 1

</llo_original>
